<compile_context>
chip_gen: v5e
topology: v5e:2x2
jax: 0.10.0
libtpu: 0.0.40
codegen_flags: <defaults>
</compile_context>

<pallas_src>
import jax
import jax.numpy as jnp
from jax.experimental import pallas as pl
from jax.experimental.pallas import tpu as pltpu


def _concat_kernel(a_ref, b_ref, c_ref, d_ref, o_ref):
    # Each input tile is (row_tile, C); output tile is (row_tile, 4*C).
    # C is a multiple of 128, so every output slice is lane-aligned and the
    # stores lower to clean unmasked vst (no vst.msk partial stores).
    C = a_ref.shape[-1]
    o_ref[:, 0 * C:1 * C] = a_ref[...]
    o_ref[:, 1 * C:2 * C] = b_ref[...]
    o_ref[:, 2 * C:3 * C] = c_ref[...]
    o_ref[:, 3 * C:4 * C] = d_ref[...]


def _choose_row_tile(rows, C, itemsize, vmem_budget_bytes=16 << 20):
    """VMEM-budgeted row tile.

    Per-row pipelined footprint = 4 inputs (4*C) + 1 output (4*C) = 8*C elements,
    doubled for double-buffering.  Budget is kept at 16 MiB so the same tile fits
    the scoped-VMEM defaults on v5e (16 MiB), v6e (32 MiB) and v7x (32 MiB of a
    64 MiB physical VMEM) without touching vmem_limit_bytes.
    """
    sublane = {4: 8, 2: 16, 1: 32}.get(itemsize, 8)
    if rows <= sublane:
        # Tiny problem: single full-array block (full dims are always legal).
        return rows

    bytes_per_row = 2 * (8 * C) * itemsize
    cap = max(sublane, min(2048, (vmem_budget_bytes // bytes_per_row) // sublane * sublane))
    tile = min(cap, rows)

    # Ensure at least 2 grid steps so the "parallel" row axis can be sharded
    # across both TensorCores on v7x (and pipelining has something to overlap).
    if tile * 2 > rows:
        half = (rows + 1) // 2
        tile = max(sublane, ((half + sublane - 1) // sublane) * sublane)
    return tile


def concat_last_dim(x1, x2, x3, x4, *, row_tile=None):
    """Pallas equivalent of torch.cat([x1, x2, x3, x4], dim=-1) for NHWC inputs."""
    assert x1.shape == x2.shape == x3.shape == x4.shape
    assert x1.dtype == x2.dtype == x3.dtype == x4.dtype
    *lead, C = x1.shape
    # Keep the concat lane-aligned: unaligned C would silently degrade to masked
    # partial stores (the biggest measured lever for copy kernels).
    assert C % 128 == 0, "channel dim must be a multiple of 128 for this kernel"

    rows = 1
    for d in lead:
        rows *= d

    # Flatten leading dims so the kernel works on lane-dense 2-D slabs.
    xs = [x.reshape(rows, C) for x in (x1, x2, x3, x4)]

    itemsize = jnp.dtype(x1.dtype).itemsize
    if row_tile is None:
        row_tile = _choose_row_tile(rows, C, itemsize)

    # cdiv grid: partial edge blocks are masked on writeback, so rows need not
    # be a multiple of row_tile.
    grid = (pl.cdiv(rows, row_tile),)
    in_spec = pl.BlockSpec((row_tile, C), lambda i: (i, 0))
    out_spec = pl.BlockSpec((row_tile, 4 * C), lambda i: (i, 0))

    out_flat = pl.pallas_call(
        _concat_kernel,
        out_shape=jax.ShapeDtypeStruct((rows, 4 * C), x1.dtype),
        grid=grid,
        in_specs=[in_spec, in_spec, in_spec, in_spec],
        out_specs=out_spec,
        compiler_params=pltpu.CompilerParams(
            dimension_semantics=("parallel",),
        ),
    )(*xs)

    return out_flat.reshape(*lead, 4 * C)


if __name__ == "__main__":
    key = jax.random.PRNGKey(0)
    k1, k2, k3, k4 = jax.random.split(key, 4)
    # Shapes from the module spec: [1, 28, 28, 128] (C=128, lane-aligned;
    # rows = 784 -> row_tile = 392 -> 2 grid steps, one per v7x TensorCore).
    shape = (1, 28, 28, 128)
    x51 = jax.random.normal(k1, shape, dtype=jnp.float32)
    x52 = jax.random.normal(k2, shape, dtype=jnp.float32)
    x53 = jax.random.normal(k3, shape, dtype=jnp.float32)
    x54 = jax.random.normal(k4, shape, dtype=jnp.float32)

    out = concat_last_dim(x51, x52, x53, x54)
    out = jax.block_until_ready(out)

    ref = jnp.concatenate([x51, x52, x53, x54], axis=-1)
    assert out.shape == (1, 28, 28, 512), out.shape
    assert jnp.array_equal(out, ref), "mismatch vs jnp.concatenate reference"
    print("KERNEL_OK")
</pallas_src>

<mosaic_0001>
module attributes {stable_mosaic.version = 11 : i64} {
  func.func @_concat_kernel(%arg0: i32, %arg1: memref<392x128xf32, #tpu.memory_space<vmem>>, %arg2: memref<392x128xf32, #tpu.memory_space<vmem>>, %arg3: memref<392x128xf32, #tpu.memory_space<vmem>>, %arg4: memref<392x128xf32, #tpu.memory_space<vmem>>, %arg5: memref<392x512xf32, #tpu.memory_space<vmem>>) attributes {dimension_semantics = [#tpu.dimension_semantics<parallel>], iteration_bounds = array<i64: 2>, scalar_prefetch = 0 : i64, scratch_operands = 0 : i64, tpu.core_type = #tpu.core_type<tc>, window_params = [{transform_indices = @transform_0, window_bounds = array<i64: 392, 128>}, {transform_indices = @transform_1, window_bounds = array<i64: 392, 128>}, {transform_indices = @transform_2, window_bounds = array<i64: 392, 128>}, {transform_indices = @transform_3, window_bounds = array<i64: 392, 128>}, {transform_indices = @transform_4, window_bounds = array<i64: 392, 512>}]} {
    %c0 = arith.constant 0 : index
    %c0_0 = arith.constant 0 : index
    %0 = vector.load %arg1[%c0, %c0_0] : memref<392x128xf32, #tpu.memory_space<vmem>>, vector<392x128xf32>
    %c0_1 = arith.constant 0 : index
    %c0_2 = arith.constant 0 : index
    %1 = vector.load %arg5[%c0_1, %c0_2] : memref<392x512xf32, #tpu.memory_space<vmem>>, vector<392x128xf32>
    tpu.vector_store %arg5[%c0_1, %c0_2], %0 {strides = array<i32>} : memref<392x512xf32, #tpu.memory_space<vmem>>, vector<392x128xf32>,
    %c0_3 = arith.constant 0 : index
    %c0_4 = arith.constant 0 : index
    %2 = vector.load %arg2[%c0_3, %c0_4] : memref<392x128xf32, #tpu.memory_space<vmem>>, vector<392x128xf32>
    %c0_5 = arith.constant 0 : index
    %c128 = arith.constant 128 : index
    %3 = vector.load %arg5[%c0_5, %c128] : memref<392x512xf32, #tpu.memory_space<vmem>>, vector<392x128xf32>
    tpu.vector_store %arg5[%c0_5, %c128], %2 {strides = array<i32>} : memref<392x512xf32, #tpu.memory_space<vmem>>, vector<392x128xf32>,
    %c0_6 = arith.constant 0 : index
    %c0_7 = arith.constant 0 : index
    %4 = vector.load %arg3[%c0_6, %c0_7] : memref<392x128xf32, #tpu.memory_space<vmem>>, vector<392x128xf32>
    %c0_8 = arith.constant 0 : index
    %c256 = arith.constant 256 : index
    %5 = vector.load %arg5[%c0_8, %c256] : memref<392x512xf32, #tpu.memory_space<vmem>>, vector<392x128xf32>
    tpu.vector_store %arg5[%c0_8, %c256], %4 {strides = array<i32>} : memref<392x512xf32, #tpu.memory_space<vmem>>, vector<392x128xf32>,
    %c0_9 = arith.constant 0 : index
    %c0_10 = arith.constant 0 : index
    %6 = vector.load %arg4[%c0_9, %c0_10] : memref<392x128xf32, #tpu.memory_space<vmem>>, vector<392x128xf32>
    %c0_11 = arith.constant 0 : index
    %c384 = arith.constant 384 : index
    %7 = vector.load %arg5[%c0_11, %c384] : memref<392x512xf32, #tpu.memory_space<vmem>>, vector<392x128xf32>
    tpu.vector_store %arg5[%c0_11, %c384], %6 {strides = array<i32>} : memref<392x512xf32, #tpu.memory_space<vmem>>, vector<392x128xf32>,
    return
  }
  func.func @transform_0(%arg0: i32) -> (i32, i32) {
    %c0_i32 = arith.constant 0 : i32
    %c0_i32_0 = arith.constant 0 : i32
    return %arg0, %c0_i32 : i32, i32
  }
  func.func @transform_1(%arg0: i32) -> (i32, i32) {
    %c0_i32 = arith.constant 0 : i32
    %c0_i32_0 = arith.constant 0 : i32
    return %arg0, %c0_i32 : i32, i32
  }
  func.func @transform_2(%arg0: i32) -> (i32, i32) {
    %c0_i32 = arith.constant 0 : i32
    %c0_i32_0 = arith.constant 0 : i32
    return %arg0, %c0_i32 : i32, i32
  }
  func.func @transform_3(%arg0: i32) -> (i32, i32) {
    %c0_i32 = arith.constant 0 : i32
    %c0_i32_0 = arith.constant 0 : i32
    return %arg0, %c0_i32 : i32, i32
  }
  func.func @transform_4(%arg0: i32) -> (i32, i32) {
    %c0_i32 = arith.constant 0 : i32
    %c0_i32_0 = arith.constant 0 : i32
    return %arg0, %c0_i32 : i32, i32
  }
}

</mosaic_0001>

<llo_original>
// kernel: tpu_custom_call.1
$region0: #{tpu_custom_call.1}
  #allocation0 [shape = 'u32[]', space=smem, size = 0x4, offset = 0x4, fixed_abs, tag = 'smem constant byte address 0x4 - core index']
  #allocation1 [shape = 'u32[72,128]{1,0:T(1,128)}', space=vmem, size = 0x9000, scoped, tag = 'internal scratch']
  %s0 = inlined_call_operand.hbm [shape: f32[784,128], index: 0, kind: input, shape index: {}]
  %s1 = inlined_call_operand.hbm [shape: f32[784,128], index: 1, kind: input, shape index: {}]
  %s2 = inlined_call_operand.hbm [shape: f32[784,128], index: 2, kind: input, shape index: {}]
  %s3 = inlined_call_operand.hbm [shape: f32[784,128], index: 3, kind: input, shape index: {}]
  %s4 = inlined_call_operand.hbm [shape: f32[784,512], index: 4, kind: output, shape index: {}]
  %s5 = sld [smem:[#allocation0]]
  $region65: #{tpu_custom_call.1} parent=0
    _
  %s7 = ssub.s32 1, %s5
  %s8 = scalar_select 0, %s7, %s5
  $region1: #{tpu_custom_call.1} parent=0
    #allocation2 [shape = 'u8[401408]{0}', space=vmem, size = 0x62000, scoped, tag = 'input window, operand 0']
    #allocation3 [shape = 's32[2]{0}', space=sflag, size = 0x8, scoped, tag = 'scoped memory for tpu_custom_call.1']
    #allocation4 [shape = 's32[2]{0}', space=sflag, size = 0x8, scoped, tag = 'scoped memory for tpu_custom_call.1']
    #allocation5 [shape = 'u8[401408]{0}', space=vmem, size = 0x62000, scoped, tag = 'input window, operand 1']
    #allocation6 [shape = 's32[2]{0}', space=sflag, size = 0x8, scoped, tag = 'scoped memory for tpu_custom_call.1']
    #allocation7 [shape = 'u8[401408]{0}', space=vmem, size = 0x62000, scoped, tag = 'input window, operand 2']
    #allocation8 [shape = 'u8[401408]{0}', space=vmem, size = 0x62000, scoped, tag = 'input window, operand 3']
    #allocation9 [shape = 's32[2]{0}', space=sflag, size = 0x8, scoped, tag = 'scoped memory for tpu_custom_call.1']
    #allocation10 [shape = 'u8[1605632]{0}', space=vmem, size = 0x188000, scoped, tag = 'output window, operand 0']
    %9 = vsyncpa [#allocation3], 0
    %s10 = scalar_lea.sflag [#allocation3], 1
    %11 = vsyncpa %s10, 0
    %12 = vsyncpa [#allocation6], 0
    %s13 = scalar_lea.sflag [#allocation6], 1
    %14 = vsyncpa %s13, 0
    %15 = vsyncpa [#allocation9], 0
    %s16 = scalar_lea.sflag [#allocation9], 1
    %17 = vsyncpa %s16, 0
    %18 = vsyncpa [#allocation4], 0
    %s19 = scalar_lea.sflag [#allocation4], 1
    %20 = vsyncpa %s19, 0
    loop: start=0, step=1, limit=4
    $region2: #{tpu_custom_call.1} parent=1 // loop_pre_header
      _
    $region3: #{tpu_custom_call.1} parent=1 // loop_header
      %s22 = sphi 0, %s26
      %p23 = scmp.ge.s32.totalorder %s22, 4
      %s32 = sphi 0, %s34
      %s35 = sphi 0, %s32
      %s36 = sphi 0, %s35
      %s52 = sphi 0, %s36
      %s58 = sphi 0, %s60
      %s61 = sphi 0, %s58
      %s62 = sphi 0, %s61
      %s78 = sphi 0, %s62
      %s84 = sphi 0, %s86
      %s87 = sphi 0, %s84
      %s88 = sphi 0, %s87
      %s104 = sphi 0, %s88
      %s110 = sphi 0, %s112
      %s113 = sphi 0, %s110
      %s114 = sphi 0, %s113
      %s130 = sphi 0, %s114
      %s136 = sphi 0, %s138
      %s139 = sphi 0, %s136
      %s140 = sphi 0, %s139
      %s156 = sphi 0, %s140
    $region4: #{tpu_custom_call.1} parent=1 // loop_header_branch
      %25 = sbr.rel (%p23) target = $region8
    $region5: #{tpu_custom_call.1} parent=1 // loop_body
      %s27 = ssub.s32 %s22, 1
      %s28 = ssub.s32 %s22, 2
      %s29 = sadd.s32 %s22, 1
      %s30 = ssub.s32 %s22, %s29
      %p31 = scmp.eq.s32.totalorder %s30, 0
      %s33 = sadd.s32 %s32, 1
      %s34 = scalar_select %p31, %s32, %s33
      %p37 = pneg %p31
      %p38 = scmp.eq.s32.totalorder %s22, 1
      %p39 = por %p37, %p38
      %p40 = scmp.ne.s32.totalorder %s32, %s35
      %p41 = scmp.eq.s32.totalorder %s22, 0
      %p42 = por %p40, %p41
      %p43 = scmp.ne.s32.totalorder %s32, %s35
      %p44 = scmp.eq.s32.totalorder %s27, 1
      %p45 = por %p43, %p44
      %p46 = scmp.ne.s32.totalorder %s35, %s36
      %p47 = scmp.eq.s32.totalorder %s27, 0
      %p48 = por %p46, %p47
      %p49 = scmp.ne.s32.totalorder %s35, %s36
      %p50 = scmp.eq.s32.totalorder %s28, 1
      %p51 = por %p49, %p50
      %p53 = scmp.ne.s32.totalorder %s36, %s52
      %p54 = scmp.eq.s32.totalorder %s28, 0
      %p55 = por %p53, %p54
      %s56 = ssub.s32 %s22, %s29
      %p57 = scmp.eq.s32.totalorder %s56, 0
      %s59 = sadd.s32 %s58, 1
      %s60 = scalar_select %p57, %s58, %s59
      %p63 = pneg %p57
      %p64 = scmp.eq.s32.totalorder %s22, 1
      %p65 = por %p63, %p64
      %p66 = scmp.ne.s32.totalorder %s58, %s61
      %p67 = scmp.eq.s32.totalorder %s22, 0
      %p68 = por %p66, %p67
      %p69 = scmp.ne.s32.totalorder %s58, %s61
      %p70 = scmp.eq.s32.totalorder %s27, 1
      %p71 = por %p69, %p70
      %p72 = scmp.ne.s32.totalorder %s61, %s62
      %p73 = scmp.eq.s32.totalorder %s27, 0
      %p74 = por %p72, %p73
      %p75 = scmp.ne.s32.totalorder %s61, %s62
      %p76 = scmp.eq.s32.totalorder %s28, 1
      %p77 = por %p75, %p76
      %p79 = scmp.ne.s32.totalorder %s62, %s78
      %p80 = scmp.eq.s32.totalorder %s28, 0
      %p81 = por %p79, %p80
      %s82 = ssub.s32 %s22, %s29
      %p83 = scmp.eq.s32.totalorder %s82, 0
      %s85 = sadd.s32 %s84, 1
      %s86 = scalar_select %p83, %s84, %s85
      %p89 = pneg %p83
      %p90 = scmp.eq.s32.totalorder %s22, 1
      %p91 = por %p89, %p90
      %p92 = scmp.ne.s32.totalorder %s84, %s87
      %p93 = scmp.eq.s32.totalorder %s22, 0
      %p94 = por %p92, %p93
      %p95 = scmp.ne.s32.totalorder %s84, %s87
      %p96 = scmp.eq.s32.totalorder %s27, 1
      %p97 = por %p95, %p96
      %p98 = scmp.ne.s32.totalorder %s87, %s88
      %p99 = scmp.eq.s32.totalorder %s27, 0
      %p100 = por %p98, %p99
      %p101 = scmp.ne.s32.totalorder %s87, %s88
      %p102 = scmp.eq.s32.totalorder %s28, 1
      %p103 = por %p101, %p102
      %p105 = scmp.ne.s32.totalorder %s88, %s104
      %p106 = scmp.eq.s32.totalorder %s28, 0
      %p107 = por %p105, %p106
      %s108 = ssub.s32 %s22, %s29
      %p109 = scmp.eq.s32.totalorder %s108, 0
      %s111 = sadd.s32 %s110, 1
      %s112 = scalar_select %p109, %s110, %s111
      %p115 = pneg %p109
      %p116 = scmp.eq.s32.totalorder %s22, 1
      %p117 = por %p115, %p116
      %p118 = scmp.ne.s32.totalorder %s110, %s113
      %p119 = scmp.eq.s32.totalorder %s22, 0
      %p120 = por %p118, %p119
      %p121 = scmp.ne.s32.totalorder %s110, %s113
      %p122 = scmp.eq.s32.totalorder %s27, 1
      %p123 = por %p121, %p122
      %p124 = scmp.ne.s32.totalorder %s113, %s114
      %p125 = scmp.eq.s32.totalorder %s27, 0
      %p126 = por %p124, %p125
      %p127 = scmp.ne.s32.totalorder %s113, %s114
      %p128 = scmp.eq.s32.totalorder %s28, 1
      %p129 = por %p127, %p128
      %p131 = scmp.ne.s32.totalorder %s114, %s130
      %p132 = scmp.eq.s32.totalorder %s28, 0
      %p133 = por %p131, %p132
      %s134 = ssub.s32 %s22, %s29
      %p135 = scmp.eq.s32.totalorder %s134, 0
      %s137 = sadd.s32 %s136, 1
      %s138 = scalar_select %p135, %s136, %s137
      %p141 = pneg %p135
      %p142 = scmp.eq.s32.totalorder %s22, 1
      %p143 = por %p141, %p142
      %p144 = scmp.ne.s32.totalorder %s136, %s139
      %p145 = scmp.eq.s32.totalorder %s22, 0
      %p146 = por %p144, %p145
      %p147 = scmp.ne.s32.totalorder %s136, %s139
      %p148 = scmp.eq.s32.totalorder %s27, 1
      %p149 = por %p147, %p148
      %p150 = scmp.ne.s32.totalorder %s139, %s140
      %p151 = scmp.eq.s32.totalorder %s27, 0
      %p152 = por %p150, %p151
      %p153 = scmp.ne.s32.totalorder %s139, %s140
      %p154 = scmp.eq.s32.totalorder %s28, 1
      %p155 = por %p153, %p154
      %p157 = scmp.ne.s32.totalorder %s140, %s156
      %p158 = scmp.eq.s32.totalorder %s28, 0
      %p159 = por %p157, %p158
      %p160 = scmp.le.s32.totalorder 1, %s22
      %p161 = scmp.lt.s32.totalorder %s22, 3
      %p162 = pnand %p160, %p161
      %p163 = pneg %p162
      // Predicated region
      $region9: #{tpu_custom_call.1} parent=5 // pred_check
        _
      $region10: #{tpu_custom_call.1} parent=5 // pred_check_branch
        %165 = sbr.rel (%p162) target = $region12
      $region11: #{tpu_custom_call.1} parent=5 // pred_region
        %s166 = ssub.s32 %s22, 1
      $region12: #{tpu_custom_call.1} parent=5 // pred_fallthru
        _
      %p167 = scmp.lt.s32.totalorder %s22, 2
      // Predicated region
      $region13: #{tpu_custom_call.1} parent=5 // pred_check
        %p168 = pneg %p167
      $region14: #{tpu_custom_call.1} parent=5 // pred_check_branch
        %170 = sbr.rel (%p168) target = $region16
      $region15: #{tpu_custom_call.1} parent=5 // pred_region
        // Predicated region
        $region17: #{tpu_custom_call.1} parent=15 // pred_check
          %p171 = pneg %p42
        $region18: #{tpu_custom_call.1} parent=15 // pred_check_branch
          %173 = sbr.rel (%p171) target = $region20
        $region19: #{tpu_custom_call.1} parent=15 // pred_region
          %s174 = sand.u32 %s32, 1
          %s175 = scalar_lea.sflag [#allocation3], %s174
          %s176 = sand.u32 %s32, 1
          %s177 = smul.addr %s176, 392
          %s178 = scalar_lea.vmem [#allocation2], %s177
          %s179 = smul.u32 49, %s22
          %181 = vsyncadd %s175, 0
          %s182 = smul.addr %s179, 8
          %s183 = scalar_lea.hbm %s0, %s182
          %s184 = sshll.u32 %s183, 4
          %s185 = int_to_ptr.hbm [resolvable:$true] %s184
          %s186 = sshll.u32 %s178, 4
          %s187 = int_to_ptr.vmem [resolvable:$true] %s186
          %192 = dma.hbm_to_vmem [thread:$0]  %s185, 6272, %s187, %s175, 128, 128, 8
        $region20: #{tpu_custom_call.1} parent=15 // pred_fallthru
          _
        // Predicated region
        $region21: #{tpu_custom_call.1} parent=15 // pred_check
          %p193 = pneg %p68
        $region22: #{tpu_custom_call.1} parent=15 // pred_check_branch
          %195 = sbr.rel (%p193) target = $region24
        $region23: #{tpu_custom_call.1} parent=15 // pred_region
          %s196 = sand.u32 %s22, 1
          %s197 = scalar_lea.sflag [#allocation6], %s196
          %s198 = sand.u32 %s58, 1
          %s199 = smul.addr %s198, 392
          %s200 = scalar_lea.vmem [#allocation5], %s199
          %s201 = smul.u32 49, %s22
          %203 = vsyncadd %s197, 0
          %s204 = smul.addr %s201, 8
          %s205 = scalar_lea.hbm %s1, %s204
          %s206 = sshll.u32 %s205, 4
          %s207 = int_to_ptr.hbm [resolvable:$true] %s206
          %s208 = sshll.u32 %s200, 4
          %s209 = int_to_ptr.vmem [resolvable:$true] %s208
          %214 = dma.hbm_to_vmem [thread:$0]  %s207, 6272, %s209, %s197, 128, 128, 8
        $region24: #{tpu_custom_call.1} parent=15 // pred_fallthru
          _
        // Predicated region
        $region25: #{tpu_custom_call.1} parent=15 // pred_check
          %p215 = pneg %p94
        $region26: #{tpu_custom_call.1} parent=15 // pred_check_branch
          %217 = sbr.rel (%p215) target = $region28
        $region27: #{tpu_custom_call.1} parent=15 // pred_region
          %s218 = sand.u32 %s22, 1
          %s219 = scalar_lea.sflag [#allocation6], %s218
          %s220 = sand.u32 %s84, 1
          %s221 = smul.addr %s220, 392
          %s222 = scalar_lea.vmem [#allocation7], %s221
          %s223 = smul.u32 49, %s22
          %225 = vsyncadd %s219, 0
          %s226 = smul.addr %s223, 8
          %s227 = scalar_lea.hbm %s2, %s226
          %s228 = sshll.u32 %s227, 4
          %s229 = int_to_ptr.hbm [resolvable:$true] %s228
          %s230 = sshll.u32 %s222, 4
          %s231 = int_to_ptr.vmem [resolvable:$true] %s230
          %236 = dma.hbm_to_vmem [thread:$0]  %s229, 6272, %s231, %s219, 128, 128, 8
        $region28: #{tpu_custom_call.1} parent=15 // pred_fallthru
          _
        // Predicated region
        $region29: #{tpu_custom_call.1} parent=15 // pred_check
          %p237 = pneg %p120
        $region30: #{tpu_custom_call.1} parent=15 // pred_check_branch
          %239 = sbr.rel (%p237) target = $region32
        $region31: #{tpu_custom_call.1} parent=15 // pred_region
          %s240 = sand.u32 %s110, 1
          %s241 = scalar_lea.sflag [#allocation9], %s240
          %s242 = sand.u32 %s110, 1
          %s243 = smul.addr %s242, 392
          %s244 = scalar_lea.vmem [#allocation8], %s243
          %s245 = smul.u32 49, %s22
          %247 = vsyncadd %s241, 0
          %s248 = smul.addr %s245, 8
          %s249 = scalar_lea.hbm %s3, %s248
          %s250 = sshll.u32 %s249, 4
          %s251 = int_to_ptr.hbm [resolvable:$true] %s250
          %s252 = sshll.u32 %s244, 4
          %s253 = int_to_ptr.vmem [resolvable:$true] %s252
          %258 = dma.hbm_to_vmem [thread:$0]  %s251, 6272, %s253, %s241, 128, 128, 8
        $region32: #{tpu_custom_call.1} parent=15 // pred_fallthru
          _
      $region16: #{tpu_custom_call.1} parent=5 // pred_fallthru
        _
      %p259 = scmp.le.s32.totalorder 1, %s22
      %p260 = scmp.lt.s32.totalorder %s22, 3
      %p261 = pnand %p259, %p260
      %p262 = pneg %p261
      // Predicated region
      $region33: #{tpu_custom_call.1} parent=5 // pred_check
        _
      $region34: #{tpu_custom_call.1} parent=5 // pred_check_branch
        %264 = sbr.rel (%p261) target = $region36
      $region35: #{tpu_custom_call.1} parent=5 // pred_region
        %s265 = ssub.s32 %s22, 1
        %s266 = sand.u32 %s35, 1
        %s267 = scalar_lea.sflag [#allocation3], %s266
        %s268 = sand.u32 %s35, 1
        %s269 = smul.addr %s268, 392
        %s270 = scalar_lea.vmem [#allocation2], %s269
        // Predicated region
        $region37: #{tpu_custom_call.1} parent=35 // pred_check
          %p271 = pneg %p48
        $region38: #{tpu_custom_call.1} parent=35 // pred_check_branch
          %273 = sbr.rel (%p271) target = $region40
        $region39: #{tpu_custom_call.1} parent=35 // pred_region
          %275 = dma.done %s267, 6272
        $region40: #{tpu_custom_call.1} parent=35 // pred_fallthru
          _
        %s276 = sand.u32 %s27, 1
        %s277 = scalar_lea.sflag [#allocation6], %s276
        %s278 = sand.u32 %s61, 1
        %s279 = smul.addr %s278, 392
        %s280 = scalar_lea.vmem [#allocation5], %s279
        // Predicated region
        $region41: #{tpu_custom_call.1} parent=35 // pred_check
          %p281 = pneg %p74
        $region42: #{tpu_custom_call.1} parent=35 // pred_check_branch
          %283 = sbr.rel (%p281) target = $region44
        $region43: #{tpu_custom_call.1} parent=35 // pred_region
          %285 = dma.done %s277, 6272
        $region44: #{tpu_custom_call.1} parent=35 // pred_fallthru
          _
        %s286 = sand.u32 %s27, 1
        %s287 = scalar_lea.sflag [#allocation6], %s286
        %s288 = sand.u32 %s87, 1
        %s289 = smul.addr %s288, 392
        %s290 = scalar_lea.vmem [#allocation7], %s289
        // Predicated region
        $region45: #{tpu_custom_call.1} parent=35 // pred_check
          %p291 = pneg %p100
        $region46: #{tpu_custom_call.1} parent=35 // pred_check_branch
          %293 = sbr.rel (%p291) target = $region48
        $region47: #{tpu_custom_call.1} parent=35 // pred_region
          %295 = dma.done %s287, 6272
        $region48: #{tpu_custom_call.1} parent=35 // pred_fallthru
          _
        %s296 = sand.u32 %s113, 1
        %s297 = scalar_lea.sflag [#allocation9], %s296
        %s298 = sand.u32 %s113, 1
        %s299 = smul.addr %s298, 392
        %s300 = scalar_lea.vmem [#allocation8], %s299
        // Predicated region
        $region49: #{tpu_custom_call.1} parent=35 // pred_check
          %p301 = pneg %p126
        $region50: #{tpu_custom_call.1} parent=35 // pred_check_branch
          %303 = sbr.rel (%p301) target = $region52
        $region51: #{tpu_custom_call.1} parent=35 // pred_region
          %305 = dma.done %s297, 6272
        $region52: #{tpu_custom_call.1} parent=35 // pred_fallthru
          _
        %s306 = sand.u32 %s35, 1
        %s307 = scalar_lea.sflag [#allocation3], %s306
        %s308 = sand.u32 %s35, 1
        %s309 = smul.addr %s308, 392
        %s310 = scalar_lea.vmem [#allocation2], %s309
        %p311 = pneg %p48
        %p312 = pneg %p45
        %s313 = sand.u32 %s27, 1
        %s314 = scalar_lea.sflag [#allocation6], %s313
        %s315 = sand.u32 %s61, 1
        %s316 = smul.addr %s315, 392
        %s317 = scalar_lea.vmem [#allocation5], %s316
        %p318 = pneg %p74
        %p319 = pneg %p71
        %s320 = sand.u32 %s27, 1
        %s321 = scalar_lea.sflag [#allocation6], %s320
        %s322 = sand.u32 %s87, 1
        %s323 = smul.addr %s322, 392
        %s324 = scalar_lea.vmem [#allocation7], %s323
        %p325 = pneg %p100
        %p326 = pneg %p97
        %s327 = sand.u32 %s113, 1
        %s328 = scalar_lea.sflag [#allocation9], %s327
        %s329 = sand.u32 %s113, 1
        %s330 = smul.addr %s329, 392
        %s331 = scalar_lea.vmem [#allocation8], %s330
        %p332 = pneg %p126
        %p333 = pneg %p123
        %p334 = pneg %p152
        %p335 = pneg %p149
        %s336 = sand.u32 %s139, 1
        %s337 = scalar_lea.sflag [#allocation4], %s336
        %s338 = sand.u32 %s139, 1
        %s339 = smul.addr %s338, 1568
        %s340 = scalar_lea.vmem [#allocation10], %s339
        %s341 = smul.u32 49, %s27
        %s342 = smul.u32 49, %s27
        %s343 = smul.u32 49, %s27
        %s344 = smul.u32 49, %s27
        %s345 = smul.u32 49, %s27
        %v346 = vld [vmem:[%s270] sm:$0xff]
        %v347 = vld [vmem:[%s270 + $0x8] sm:$0xff]
        %v348 = vld [vmem:[%s270 + $0x10] sm:$0xff]
        %v349 = vld [vmem:[%s270 + $0x18] sm:$0xff]
        %v350 = vld [vmem:[%s270 + $0x20] sm:$0xff]
        %v351 = vld [vmem:[%s270 + $0x28] sm:$0xff]
        %v352 = vld [vmem:[%s270 + $0x30] sm:$0xff]
        %v353 = vld [vmem:[%s270 + $0x38] sm:$0xff]
        %v354 = vld [vmem:[%s270 + $0x40] sm:$0xff]
        %v355 = vld [vmem:[%s270 + $0x48] sm:$0xff]
        %v356 = vld [vmem:[%s270 + $0x50] sm:$0xff]
        %v357 = vld [vmem:[%s270 + $0x58] sm:$0xff]
        %v358 = vld [vmem:[%s270 + $0x60] sm:$0xff]
        %v359 = vld [vmem:[%s270 + $0x68] sm:$0xff]
        %v360 = vld [vmem:[%s270 + $0x70] sm:$0xff]
        %v361 = vld [vmem:[%s270 + $0x78] sm:$0xff]
        %v362 = vld [vmem:[%s270 + $0x80] sm:$0xff]
        %v363 = vld [vmem:[%s270 + $0x88] sm:$0xff]
        %v364 = vld [vmem:[%s270 + $0x90] sm:$0xff]
        %v365 = vld [vmem:[%s270 + $0x98] sm:$0xff]
        %v366 = vld [vmem:[%s270 + $0xa0] sm:$0xff]
        %v367 = vld [vmem:[%s270 + $0xa8] sm:$0xff]
        %v368 = vld [vmem:[%s270 + $0xb0] sm:$0xff]
        %v369 = vld [vmem:[%s270 + $0xb8] sm:$0xff]
        %v370 = vld [vmem:[%s270 + $0xc0] sm:$0xff]
        %v371 = vld [vmem:[%s270 + $0xc8] sm:$0xff]
        %v372 = vld [vmem:[%s270 + $0xd0] sm:$0xff]
        %v373 = vld [vmem:[%s270 + $0xd8] sm:$0xff]
        %v374 = vld [vmem:[%s270 + $0xe0] sm:$0xff]
        %v375 = vld [vmem:[%s270 + $0xe8] sm:$0xff]
        %v376 = vld [vmem:[%s270 + $0xf0] sm:$0xff]
        %v377 = vld [vmem:[%s270 + $0xf8] sm:$0xff]
        %v378 = vld [vmem:[%s270 + $0x100] sm:$0xff]
        %v379 = vld [vmem:[%s270 + $0x108] sm:$0xff]
        %v380 = vld [vmem:[%s270 + $0x110] sm:$0xff]
        %v381 = vld [vmem:[%s270 + $0x118] sm:$0xff]
        %v382 = vld [vmem:[%s270 + $0x120] sm:$0xff]
        %v383 = vld [vmem:[%s270 + $0x128] sm:$0xff]
        %v384 = vld [vmem:[%s270 + $0x130] sm:$0xff]
        %v385 = vld [vmem:[%s270 + $0x138] sm:$0xff]
        %v386 = vld [vmem:[%s270 + $0x140] sm:$0xff]
        %v387 = vld [vmem:[%s270 + $0x148] sm:$0xff]
        %v388 = vld [vmem:[%s270 + $0x150] sm:$0xff]
        %v389 = vld [vmem:[%s270 + $0x158] sm:$0xff]
        %v390 = vld [vmem:[%s270 + $0x160] sm:$0xff]
        %v391 = vld [vmem:[%s270 + $0x168] sm:$0xff]
        %v392 = vld [vmem:[%s270 + $0x170] sm:$0xff]
        %v393 = vld [vmem:[%s270 + $0x178] sm:$0xff]
        %v394 = vld [vmem:[%s270 + $0x180] sm:$0xff]
        %395 = vst [vmem:[%s340] sm:$0xff] %v346
        %396 = vst [vmem:[%s340 + $0x20] sm:$0xff] %v347
        %397 = vst [vmem:[%s340 + $0x40] sm:$0xff] %v348
        %398 = vst [vmem:[%s340 + $0x60] sm:$0xff] %v349
        %399 = vst [vmem:[%s340 + $0x80] sm:$0xff] %v350
        %400 = vst [vmem:[%s340 + $0xa0] sm:$0xff] %v351
        %401 = vst [vmem:[%s340 + $0xc0] sm:$0xff] %v352
        %402 = vst [vmem:[%s340 + $0xe0] sm:$0xff] %v353
        %403 = vst [vmem:[%s340 + $0x100] sm:$0xff] %v354
        %404 = vst [vmem:[%s340 + $0x120] sm:$0xff] %v355
        %405 = vst [vmem:[%s340 + $0x140] sm:$0xff] %v356
        %406 = vst [vmem:[%s340 + $0x160] sm:$0xff] %v357
        %407 = vst [vmem:[%s340 + $0x180] sm:$0xff] %v358
        %408 = vst [vmem:[%s340 + $0x1a0] sm:$0xff] %v359
        %409 = vst [vmem:[%s340 + $0x1c0] sm:$0xff] %v360
        %410 = vst [vmem:[%s340 + $0x1e0] sm:$0xff] %v361
        %411 = vst [vmem:[%s340 + $0x200] sm:$0xff] %v362
        %412 = vst [vmem:[%s340 + $0x220] sm:$0xff] %v363
        %413 = vst [vmem:[%s340 + $0x240] sm:$0xff] %v364
        %414 = vst [vmem:[%s340 + $0x260] sm:$0xff] %v365
        %415 = vst [vmem:[%s340 + $0x280] sm:$0xff] %v366
        %416 = vst [vmem:[%s340 + $0x2a0] sm:$0xff] %v367
        %417 = vst [vmem:[%s340 + $0x2c0] sm:$0xff] %v368
        %418 = vst [vmem:[%s340 + $0x2e0] sm:$0xff] %v369
        %419 = vst [vmem:[%s340 + $0x300] sm:$0xff] %v370
        %420 = vst [vmem:[%s340 + $0x320] sm:$0xff] %v371
        %421 = vst [vmem:[%s340 + $0x340] sm:$0xff] %v372
        %422 = vst [vmem:[%s340 + $0x360] sm:$0xff] %v373
        %423 = vst [vmem:[%s340 + $0x380] sm:$0xff] %v374
        %424 = vst [vmem:[%s340 + $0x3a0] sm:$0xff] %v375
        %425 = vst [vmem:[%s340 + $0x3c0] sm:$0xff] %v376
        %426 = vst [vmem:[%s340 + $0x3e0] sm:$0xff] %v377
        %427 = vst [vmem:[%s340 + $0x400] sm:$0xff] %v378
        %428 = vst [vmem:[%s340 + $0x420] sm:$0xff] %v379
        %429 = vst [vmem:[%s340 + $0x440] sm:$0xff] %v380
        %430 = vst [vmem:[%s340 + $0x460] sm:$0xff] %v381
        %431 = vst [vmem:[%s340 + $0x480] sm:$0xff] %v382
        %432 = vst [vmem:[%s340 + $0x4a0] sm:$0xff] %v383
        %433 = vst [vmem:[%s340 + $0x4c0] sm:$0xff] %v384
        %434 = vst [vmem:[%s340 + $0x4e0] sm:$0xff] %v385
        %435 = vst [vmem:[%s340 + $0x500] sm:$0xff] %v386
        %436 = vst [vmem:[%s340 + $0x520] sm:$0xff] %v387
        %437 = vst [vmem:[%s340 + $0x540] sm:$0xff] %v388
        %438 = vst [vmem:[%s340 + $0x560] sm:$0xff] %v389
        %439 = vst [vmem:[%s340 + $0x580] sm:$0xff] %v390
        %440 = vst [vmem:[%s340 + $0x5a0] sm:$0xff] %v391
        %441 = vst [vmem:[%s340 + $0x5c0] sm:$0xff] %v392
        %442 = vst [vmem:[%s340 + $0x5e0] sm:$0xff] %v393
        %443 = vst [vmem:[%s340 + $0x600] sm:$0xff] %v394
        %v444 = vld [vmem:[%s280] sm:$0xff]
        %v445 = vld [vmem:[%s280 + $0x8] sm:$0xff]
        %v446 = vld [vmem:[%s280 + $0x10] sm:$0xff]
        %v447 = vld [vmem:[%s280 + $0x18] sm:$0xff]
        %v448 = vld [vmem:[%s280 + $0x20] sm:$0xff]
        %v449 = vld [vmem:[%s280 + $0x28] sm:$0xff]
        %v450 = vld [vmem:[%s280 + $0x30] sm:$0xff]
        %v451 = vld [vmem:[%s280 + $0x38] sm:$0xff]
        %v452 = vld [vmem:[%s280 + $0x40] sm:$0xff]
        %v453 = vld [vmem:[%s280 + $0x48] sm:$0xff]
        %v454 = vld [vmem:[%s280 + $0x50] sm:$0xff]
        %v455 = vld [vmem:[%s280 + $0x58] sm:$0xff]
        %v456 = vld [vmem:[%s280 + $0x60] sm:$0xff]
        %v457 = vld [vmem:[%s280 + $0x68] sm:$0xff]
        %v458 = vld [vmem:[%s280 + $0x70] sm:$0xff]
        %v459 = vld [vmem:[%s280 + $0x78] sm:$0xff]
        %v460 = vld [vmem:[%s280 + $0x80] sm:$0xff]
        %v461 = vld [vmem:[%s280 + $0x88] sm:$0xff]
        %v462 = vld [vmem:[%s280 + $0x90] sm:$0xff]
        %v463 = vld [vmem:[%s280 + $0x98] sm:$0xff]
        %v464 = vld [vmem:[%s280 + $0xa0] sm:$0xff]
        %v465 = vld [vmem:[%s280 + $0xa8] sm:$0xff]
        %v466 = vld [vmem:[%s280 + $0xb0] sm:$0xff]
        %v467 = vld [vmem:[%s280 + $0xb8] sm:$0xff]
        %v468 = vld [vmem:[%s280 + $0xc0] sm:$0xff]
        %v469 = vld [vmem:[%s280 + $0xc8] sm:$0xff]
        %v470 = vld [vmem:[%s280 + $0xd0] sm:$0xff]
        %v471 = vld [vmem:[%s280 + $0xd8] sm:$0xff]
        %v472 = vld [vmem:[%s280 + $0xe0] sm:$0xff]
        %v473 = vld [vmem:[%s280 + $0xe8] sm:$0xff]
        %v474 = vld [vmem:[%s280 + $0xf0] sm:$0xff]
        %v475 = vld [vmem:[%s280 + $0xf8] sm:$0xff]
        %v476 = vld [vmem:[%s280 + $0x100] sm:$0xff]
        %v477 = vld [vmem:[%s280 + $0x108] sm:$0xff]
        %v478 = vld [vmem:[%s280 + $0x110] sm:$0xff]
        %v479 = vld [vmem:[%s280 + $0x118] sm:$0xff]
        %v480 = vld [vmem:[%s280 + $0x120] sm:$0xff]
        %v481 = vld [vmem:[%s280 + $0x128] sm:$0xff]
        %v482 = vld [vmem:[%s280 + $0x130] sm:$0xff]
        %v483 = vld [vmem:[%s280 + $0x138] sm:$0xff]
        %v484 = vld [vmem:[%s280 + $0x140] sm:$0xff]
        %v485 = vld [vmem:[%s280 + $0x148] sm:$0xff]
        %v486 = vld [vmem:[%s280 + $0x150] sm:$0xff]
        %v487 = vld [vmem:[%s280 + $0x158] sm:$0xff]
        %v488 = vld [vmem:[%s280 + $0x160] sm:$0xff]
        %v489 = vld [vmem:[%s280 + $0x168] sm:$0xff]
        %v490 = vld [vmem:[%s280 + $0x170] sm:$0xff]
        %v491 = vld [vmem:[%s280 + $0x178] sm:$0xff]
        %v492 = vld [vmem:[%s280 + $0x180] sm:$0xff]
        %493 = vst [vmem:[%s340 + $0x8] sm:$0xff] %v444
        %494 = vst [vmem:[%s340 + $0x28] sm:$0xff] %v445
        %495 = vst [vmem:[%s340 + $0x48] sm:$0xff] %v446
        %496 = vst [vmem:[%s340 + $0x68] sm:$0xff] %v447
        %497 = vst [vmem:[%s340 + $0x88] sm:$0xff] %v448
        %498 = vst [vmem:[%s340 + $0xa8] sm:$0xff] %v449
        %499 = vst [vmem:[%s340 + $0xc8] sm:$0xff] %v450
        %500 = vst [vmem:[%s340 + $0xe8] sm:$0xff] %v451
        %501 = vst [vmem:[%s340 + $0x108] sm:$0xff] %v452
        %502 = vst [vmem:[%s340 + $0x128] sm:$0xff] %v453
        %503 = vst [vmem:[%s340 + $0x148] sm:$0xff] %v454
        %504 = vst [vmem:[%s340 + $0x168] sm:$0xff] %v455
        %505 = vst [vmem:[%s340 + $0x188] sm:$0xff] %v456
        %506 = vst [vmem:[%s340 + $0x1a8] sm:$0xff] %v457
        %507 = vst [vmem:[%s340 + $0x1c8] sm:$0xff] %v458
        %508 = vst [vmem:[%s340 + $0x1e8] sm:$0xff] %v459
        %509 = vst [vmem:[%s340 + $0x208] sm:$0xff] %v460
        %510 = vst [vmem:[%s340 + $0x228] sm:$0xff] %v461
        %511 = vst [vmem:[%s340 + $0x248] sm:$0xff] %v462
        %512 = vst [vmem:[%s340 + $0x268] sm:$0xff] %v463
        %513 = vst [vmem:[%s340 + $0x288] sm:$0xff] %v464
        %514 = vst [vmem:[%s340 + $0x2a8] sm:$0xff] %v465
        %515 = vst [vmem:[%s340 + $0x2c8] sm:$0xff] %v466
        %516 = vst [vmem:[%s340 + $0x2e8] sm:$0xff] %v467
        %517 = vst [vmem:[%s340 + $0x308] sm:$0xff] %v468
        %518 = vst [vmem:[%s340 + $0x328] sm:$0xff] %v469
        %519 = vst [vmem:[%s340 + $0x348] sm:$0xff] %v470
        %520 = vst [vmem:[%s340 + $0x368] sm:$0xff] %v471
        %521 = vst [vmem:[%s340 + $0x388] sm:$0xff] %v472
        %522 = vst [vmem:[%s340 + $0x3a8] sm:$0xff] %v473
        %523 = vst [vmem:[%s340 + $0x3c8] sm:$0xff] %v474
        %524 = vst [vmem:[%s340 + $0x3e8] sm:$0xff] %v475
        %525 = vst [vmem:[%s340 + $0x408] sm:$0xff] %v476
        %526 = vst [vmem:[%s340 + $0x428] sm:$0xff] %v477
        %527 = vst [vmem:[%s340 + $0x448] sm:$0xff] %v478
        %528 = vst [vmem:[%s340 + $0x468] sm:$0xff] %v479
        %529 = vst [vmem:[%s340 + $0x488] sm:$0xff] %v480
        %530 = vst [vmem:[%s340 + $0x4a8] sm:$0xff] %v481
        %531 = vst [vmem:[%s340 + $0x4c8] sm:$0xff] %v482
        %532 = vst [vmem:[%s340 + $0x4e8] sm:$0xff] %v483
        %533 = vst [vmem:[%s340 + $0x508] sm:$0xff] %v484
        %534 = vst [vmem:[%s340 + $0x528] sm:$0xff] %v485
        %535 = vst [vmem:[%s340 + $0x548] sm:$0xff] %v486
        %536 = vst [vmem:[%s340 + $0x568] sm:$0xff] %v487
        %537 = vst [vmem:[%s340 + $0x588] sm:$0xff] %v488
        %538 = vst [vmem:[%s340 + $0x5a8] sm:$0xff] %v489
        %539 = vst [vmem:[%s340 + $0x5c8] sm:$0xff] %v490
        %540 = vst [vmem:[%s340 + $0x5e8] sm:$0xff] %v491
        %541 = vst [vmem:[%s340 + $0x608] sm:$0xff] %v492
        %v542 = vld [vmem:[%s290] sm:$0xff]
        %v543 = vld [vmem:[%s290 + $0x8] sm:$0xff]
        %v544 = vld [vmem:[%s290 + $0x10] sm:$0xff]
        %v545 = vld [vmem:[%s290 + $0x18] sm:$0xff]
        %v546 = vld [vmem:[%s290 + $0x20] sm:$0xff]
        %v547 = vld [vmem:[%s290 + $0x28] sm:$0xff]
        %v548 = vld [vmem:[%s290 + $0x30] sm:$0xff]
        %v549 = vld [vmem:[%s290 + $0x38] sm:$0xff]
        %v550 = vld [vmem:[%s290 + $0x40] sm:$0xff]
        %v551 = vld [vmem:[%s290 + $0x48] sm:$0xff]
        %v552 = vld [vmem:[%s290 + $0x50] sm:$0xff]
        %v553 = vld [vmem:[%s290 + $0x58] sm:$0xff]
        %v554 = vld [vmem:[%s290 + $0x60] sm:$0xff]
        %v555 = vld [vmem:[%s290 + $0x68] sm:$0xff]
        %v556 = vld [vmem:[%s290 + $0x70] sm:$0xff]
        %v557 = vld [vmem:[%s290 + $0x78] sm:$0xff]
        %v558 = vld [vmem:[%s290 + $0x80] sm:$0xff]
        %v559 = vld [vmem:[%s290 + $0x88] sm:$0xff]
        %v560 = vld [vmem:[%s290 + $0x90] sm:$0xff]
        %v561 = vld [vmem:[%s290 + $0x98] sm:$0xff]
        %v562 = vld [vmem:[%s290 + $0xa0] sm:$0xff]
        %v563 = vld [vmem:[%s290 + $0xa8] sm:$0xff]
        %v564 = vld [vmem:[%s290 + $0xb0] sm:$0xff]
        %v565 = vld [vmem:[%s290 + $0xb8] sm:$0xff]
        %v566 = vld [vmem:[%s290 + $0xc0] sm:$0xff]
        %v567 = vld [vmem:[%s290 + $0xc8] sm:$0xff]
        %v568 = vld [vmem:[%s290 + $0xd0] sm:$0xff]
        %v569 = vld [vmem:[%s290 + $0xd8] sm:$0xff]
        %v570 = vld [vmem:[%s290 + $0xe0] sm:$0xff]
        %v571 = vld [vmem:[%s290 + $0xe8] sm:$0xff]
        %v572 = vld [vmem:[%s290 + $0xf0] sm:$0xff]
        %v573 = vld [vmem:[%s290 + $0xf8] sm:$0xff]
        %v574 = vld [vmem:[%s290 + $0x100] sm:$0xff]
        %v575 = vld [vmem:[%s290 + $0x108] sm:$0xff]
        %v576 = vld [vmem:[%s290 + $0x110] sm:$0xff]
        %v577 = vld [vmem:[%s290 + $0x118] sm:$0xff]
        %v578 = vld [vmem:[%s290 + $0x120] sm:$0xff]
        %v579 = vld [vmem:[%s290 + $0x128] sm:$0xff]
        %v580 = vld [vmem:[%s290 + $0x130] sm:$0xff]
        %v581 = vld [vmem:[%s290 + $0x138] sm:$0xff]
        %v582 = vld [vmem:[%s290 + $0x140] sm:$0xff]
        %v583 = vld [vmem:[%s290 + $0x148] sm:$0xff]
        %v584 = vld [vmem:[%s290 + $0x150] sm:$0xff]
        %v585 = vld [vmem:[%s290 + $0x158] sm:$0xff]
        %v586 = vld [vmem:[%s290 + $0x160] sm:$0xff]
        %v587 = vld [vmem:[%s290 + $0x168] sm:$0xff]
        %v588 = vld [vmem:[%s290 + $0x170] sm:$0xff]
        %v589 = vld [vmem:[%s290 + $0x178] sm:$0xff]
        %v590 = vld [vmem:[%s290 + $0x180] sm:$0xff]
        %591 = vst [vmem:[%s340 + $0x10] sm:$0xff] %v542
        %592 = vst [vmem:[%s340 + $0x30] sm:$0xff] %v543
        %593 = vst [vmem:[%s340 + $0x50] sm:$0xff] %v544
        %594 = vst [vmem:[%s340 + $0x70] sm:$0xff] %v545
        %595 = vst [vmem:[%s340 + $0x90] sm:$0xff] %v546
        %596 = vst [vmem:[%s340 + $0xb0] sm:$0xff] %v547
        %597 = vst [vmem:[%s340 + $0xd0] sm:$0xff] %v548
        %598 = vst [vmem:[%s340 + $0xf0] sm:$0xff] %v549
        %599 = vst [vmem:[%s340 + $0x110] sm:$0xff] %v550
        %600 = vst [vmem:[%s340 + $0x130] sm:$0xff] %v551
        %601 = vst [vmem:[%s340 + $0x150] sm:$0xff] %v552
        %602 = vst [vmem:[%s340 + $0x170] sm:$0xff] %v553
        %603 = vst [vmem:[%s340 + $0x190] sm:$0xff] %v554
        %604 = vst [vmem:[%s340 + $0x1b0] sm:$0xff] %v555
        %605 = vst [vmem:[%s340 + $0x1d0] sm:$0xff] %v556
        %606 = vst [vmem:[%s340 + $0x1f0] sm:$0xff] %v557
        %607 = vst [vmem:[%s340 + $0x210] sm:$0xff] %v558
        %608 = vst [vmem:[%s340 + $0x230] sm:$0xff] %v559
        %609 = vst [vmem:[%s340 + $0x250] sm:$0xff] %v560
        %610 = vst [vmem:[%s340 + $0x270] sm:$0xff] %v561
        %611 = vst [vmem:[%s340 + $0x290] sm:$0xff] %v562
        %612 = vst [vmem:[%s340 + $0x2b0] sm:$0xff] %v563
        %613 = vst [vmem:[%s340 + $0x2d0] sm:$0xff] %v564
        %614 = vst [vmem:[%s340 + $0x2f0] sm:$0xff] %v565
        %615 = vst [vmem:[%s340 + $0x310] sm:$0xff] %v566
        %616 = vst [vmem:[%s340 + $0x330] sm:$0xff] %v567
        %617 = vst [vmem:[%s340 + $0x350] sm:$0xff] %v568
        %618 = vst [vmem:[%s340 + $0x370] sm:$0xff] %v569
        %619 = vst [vmem:[%s340 + $0x390] sm:$0xff] %v570
        %620 = vst [vmem:[%s340 + $0x3b0] sm:$0xff] %v571
        %621 = vst [vmem:[%s340 + $0x3d0] sm:$0xff] %v572
        %622 = vst [vmem:[%s340 + $0x3f0] sm:$0xff] %v573
        %623 = vst [vmem:[%s340 + $0x410] sm:$0xff] %v574
        %624 = vst [vmem:[%s340 + $0x430] sm:$0xff] %v575
        %625 = vst [vmem:[%s340 + $0x450] sm:$0xff] %v576
        %626 = vst [vmem:[%s340 + $0x470] sm:$0xff] %v577
        %627 = vst [vmem:[%s340 + $0x490] sm:$0xff] %v578
        %628 = vst [vmem:[%s340 + $0x4b0] sm:$0xff] %v579
        %629 = vst [vmem:[%s340 + $0x4d0] sm:$0xff] %v580
        %630 = vst [vmem:[%s340 + $0x4f0] sm:$0xff] %v581
        %631 = vst [vmem:[%s340 + $0x510] sm:$0xff] %v582
        %632 = vst [vmem:[%s340 + $0x530] sm:$0xff] %v583
        %633 = vst [vmem:[%s340 + $0x550] sm:$0xff] %v584
        %634 = vst [vmem:[%s340 + $0x570] sm:$0xff] %v585
        %635 = vst [vmem:[%s340 + $0x590] sm:$0xff] %v586
        %636 = vst [vmem:[%s340 + $0x5b0] sm:$0xff] %v587
        %637 = vst [vmem:[%s340 + $0x5d0] sm:$0xff] %v588
        %638 = vst [vmem:[%s340 + $0x5f0] sm:$0xff] %v589
        %639 = vst [vmem:[%s340 + $0x610] sm:$0xff] %v590
        %v640 = vld [vmem:[%s300] sm:$0xff]
        %v641 = vld [vmem:[%s300 + $0x8] sm:$0xff]
        %v642 = vld [vmem:[%s300 + $0x10] sm:$0xff]
        %v643 = vld [vmem:[%s300 + $0x18] sm:$0xff]
        %v644 = vld [vmem:[%s300 + $0x20] sm:$0xff]
        %v645 = vld [vmem:[%s300 + $0x28] sm:$0xff]
        %v646 = vld [vmem:[%s300 + $0x30] sm:$0xff]
        %v647 = vld [vmem:[%s300 + $0x38] sm:$0xff]
        %v648 = vld [vmem:[%s300 + $0x40] sm:$0xff]
        %v649 = vld [vmem:[%s300 + $0x48] sm:$0xff]
        %v650 = vld [vmem:[%s300 + $0x50] sm:$0xff]
        %v651 = vld [vmem:[%s300 + $0x58] sm:$0xff]
        %v652 = vld [vmem:[%s300 + $0x60] sm:$0xff]
        %v653 = vld [vmem:[%s300 + $0x68] sm:$0xff]
        %v654 = vld [vmem:[%s300 + $0x70] sm:$0xff]
        %v655 = vld [vmem:[%s300 + $0x78] sm:$0xff]
        %v656 = vld [vmem:[%s300 + $0x80] sm:$0xff]
        %v657 = vld [vmem:[%s300 + $0x88] sm:$0xff]
        %v658 = vld [vmem:[%s300 + $0x90] sm:$0xff]
        %v659 = vld [vmem:[%s300 + $0x98] sm:$0xff]
        %v660 = vld [vmem:[%s300 + $0xa0] sm:$0xff]
        %v661 = vld [vmem:[%s300 + $0xa8] sm:$0xff]
        %v662 = vld [vmem:[%s300 + $0xb0] sm:$0xff]
        %v663 = vld [vmem:[%s300 + $0xb8] sm:$0xff]
        %v664 = vld [vmem:[%s300 + $0xc0] sm:$0xff]
        %v665 = vld [vmem:[%s300 + $0xc8] sm:$0xff]
        %v666 = vld [vmem:[%s300 + $0xd0] sm:$0xff]
        %v667 = vld [vmem:[%s300 + $0xd8] sm:$0xff]
        %v668 = vld [vmem:[%s300 + $0xe0] sm:$0xff]
        %v669 = vld [vmem:[%s300 + $0xe8] sm:$0xff]
        %v670 = vld [vmem:[%s300 + $0xf0] sm:$0xff]
        %v671 = vld [vmem:[%s300 + $0xf8] sm:$0xff]
        %v672 = vld [vmem:[%s300 + $0x100] sm:$0xff]
        %v673 = vld [vmem:[%s300 + $0x108] sm:$0xff]
        %v674 = vld [vmem:[%s300 + $0x110] sm:$0xff]
        %v675 = vld [vmem:[%s300 + $0x118] sm:$0xff]
        %v676 = vld [vmem:[%s300 + $0x120] sm:$0xff]
        %v677 = vld [vmem:[%s300 + $0x128] sm:$0xff]
        %v678 = vld [vmem:[%s300 + $0x130] sm:$0xff]
        %v679 = vld [vmem:[%s300 + $0x138] sm:$0xff]
        %v680 = vld [vmem:[%s300 + $0x140] sm:$0xff]
        %v681 = vld [vmem:[%s300 + $0x148] sm:$0xff]
        %v682 = vld [vmem:[%s300 + $0x150] sm:$0xff]
        %v683 = vld [vmem:[%s300 + $0x158] sm:$0xff]
        %v684 = vld [vmem:[%s300 + $0x160] sm:$0xff]
        %v685 = vld [vmem:[%s300 + $0x168] sm:$0xff]
        %v686 = vld [vmem:[%s300 + $0x170] sm:$0xff]
        %v687 = vld [vmem:[%s300 + $0x178] sm:$0xff]
        %v688 = vld [vmem:[%s300 + $0x180] sm:$0xff]
        %689 = vst [vmem:[%s340 + $0x18] sm:$0xff] %v640
        %690 = vst [vmem:[%s340 + $0x38] sm:$0xff] %v641
        %691 = vst [vmem:[%s340 + $0x58] sm:$0xff] %v642
        %692 = vst [vmem:[%s340 + $0x78] sm:$0xff] %v643
        %693 = vst [vmem:[%s340 + $0x98] sm:$0xff] %v644
        %694 = vst [vmem:[%s340 + $0xb8] sm:$0xff] %v645
        %695 = vst [vmem:[%s340 + $0xd8] sm:$0xff] %v646
        %696 = vst [vmem:[%s340 + $0xf8] sm:$0xff] %v647
        %697 = vst [vmem:[%s340 + $0x118] sm:$0xff] %v648
        %698 = vst [vmem:[%s340 + $0x138] sm:$0xff] %v649
        %699 = vst [vmem:[%s340 + $0x158] sm:$0xff] %v650
        %700 = vst [vmem:[%s340 + $0x178] sm:$0xff] %v651
        %701 = vst [vmem:[%s340 + $0x198] sm:$0xff] %v652
        %702 = vst [vmem:[%s340 + $0x1b8] sm:$0xff] %v653
        %703 = vst [vmem:[%s340 + $0x1d8] sm:$0xff] %v654
        %704 = vst [vmem:[%s340 + $0x1f8] sm:$0xff] %v655
        %705 = vst [vmem:[%s340 + $0x218] sm:$0xff] %v656
        %706 = vst [vmem:[%s340 + $0x238] sm:$0xff] %v657
        %707 = vst [vmem:[%s340 + $0x258] sm:$0xff] %v658
        %708 = vst [vmem:[%s340 + $0x278] sm:$0xff] %v659
        %709 = vst [vmem:[%s340 + $0x298] sm:$0xff] %v660
        %710 = vst [vmem:[%s340 + $0x2b8] sm:$0xff] %v661
        %711 = vst [vmem:[%s340 + $0x2d8] sm:$0xff] %v662
        %712 = vst [vmem:[%s340 + $0x2f8] sm:$0xff] %v663
        %713 = vst [vmem:[%s340 + $0x318] sm:$0xff] %v664
        %714 = vst [vmem:[%s340 + $0x338] sm:$0xff] %v665
        %715 = vst [vmem:[%s340 + $0x358] sm:$0xff] %v666
        %716 = vst [vmem:[%s340 + $0x378] sm:$0xff] %v667
        %717 = vst [vmem:[%s340 + $0x398] sm:$0xff] %v668
        %718 = vst [vmem:[%s340 + $0x3b8] sm:$0xff] %v669
        %719 = vst [vmem:[%s340 + $0x3d8] sm:$0xff] %v670
        %720 = vst [vmem:[%s340 + $0x3f8] sm:$0xff] %v671
        %721 = vst [vmem:[%s340 + $0x418] sm:$0xff] %v672
        %722 = vst [vmem:[%s340 + $0x438] sm:$0xff] %v673
        %723 = vst [vmem:[%s340 + $0x458] sm:$0xff] %v674
        %724 = vst [vmem:[%s340 + $0x478] sm:$0xff] %v675
        %725 = vst [vmem:[%s340 + $0x498] sm:$0xff] %v676
        %726 = vst [vmem:[%s340 + $0x4b8] sm:$0xff] %v677
        %727 = vst [vmem:[%s340 + $0x4d8] sm:$0xff] %v678
        %728 = vst [vmem:[%s340 + $0x4f8] sm:$0xff] %v679
        %729 = vst [vmem:[%s340 + $0x518] sm:$0xff] %v680
        %730 = vst [vmem:[%s340 + $0x538] sm:$0xff] %v681
        %731 = vst [vmem:[%s340 + $0x558] sm:$0xff] %v682
        %732 = vst [vmem:[%s340 + $0x578] sm:$0xff] %v683
        %733 = vst [vmem:[%s340 + $0x598] sm:$0xff] %v684
        %734 = vst [vmem:[%s340 + $0x5b8] sm:$0xff] %v685
        %735 = vst [vmem:[%s340 + $0x5d8] sm:$0xff] %v686
        %736 = vst [vmem:[%s340 + $0x5f8] sm:$0xff] %v687
        %737 = vst [vmem:[%s340 + $0x618] sm:$0xff] %v688
        %s738 = sand.u32 %s139, 1
        %s739 = scalar_lea.sflag [#allocation4], %s738
        %s740 = sand.u32 %s139, 1
        %s741 = smul.addr %s740, 1568
        %s742 = scalar_lea.vmem [#allocation10], %s741
        // Predicated region
        $region53: #{tpu_custom_call.1} parent=35 // pred_check
          %p743 = pneg %p149
        $region54: #{tpu_custom_call.1} parent=35 // pred_check_branch
          %745 = sbr.rel (%p743) target = $region56
        $region55: #{tpu_custom_call.1} parent=35 // pred_region
          %s746 = smul.u32 49, %s27
          %748 = vsyncadd %s739, 0
          %s749 = smul.addr %s746, 4
          %s750 = smul.addr %s749, 8
          %s751 = scalar_lea.hbm %s4, %s750
          %s752 = sshll.u32 %s742, 4
          %s753 = int_to_ptr.vmem [resolvable:$true] %s752
          %s754 = sshll.u32 %s751, 4
          %s755 = int_to_ptr.hbm [resolvable:$true] %s754
          %760 = dma.vmem_to_hbm [thread:$0]  %s753, 25088, %s755, %s739, 512, 512, 32
        $region56: #{tpu_custom_call.1} parent=35 // pred_fallthru
          _
      $region36: #{tpu_custom_call.1} parent=5 // pred_fallthru
        _
      %p761 = scmp.le.s32.totalorder 2, %s22
      // Predicated region
      $region57: #{tpu_custom_call.1} parent=5 // pred_check
        %p762 = pneg %p761
      $region58: #{tpu_custom_call.1} parent=5 // pred_check_branch
        %764 = sbr.rel (%p762) target = $region60
      $region59: #{tpu_custom_call.1} parent=5 // pred_region
        %s765 = ssub.s32 %s22, 2
        // Predicated region
        $region61: #{tpu_custom_call.1} parent=59 // pred_check
          %p766 = pneg %p155
        $region62: #{tpu_custom_call.1} parent=59 // pred_check_branch
          %768 = sbr.rel (%p766) target = $region64
        $region63: #{tpu_custom_call.1} parent=59 // pred_region
          %s769 = sand.u32 %s140, 1
          %s770 = scalar_lea.sflag [#allocation4], %s769
          %s771 = sand.u32 %s140, 1
          %s772 = smul.addr %s771, 1568
          %s773 = scalar_lea.vmem [#allocation10], %s772
          %775 = dma.done %s770, 25088
        $region64: #{tpu_custom_call.1} parent=59 // pred_fallthru
          _
      $region60: #{tpu_custom_call.1} parent=5 // pred_fallthru
        _
    $region6: #{tpu_custom_call.1} parent=1 // loop_footer
      %s26 = sadd.s32 1, %s22
    $region7: #{tpu_custom_call.1} parent=1 // loop_footer_branch
      %21 = sbr.rel target = $region3
    $region8: #{tpu_custom_call.1} parent=1 // loop_exit
      _
    %776 = vsyncpa [#allocation3], 1
    %s777 = scalar_lea.sflag [#allocation3], 1
    %778 = vsyncpa %s777, 1
    %779 = vsyncpa [#allocation6], 1
    %s780 = scalar_lea.sflag [#allocation6], 1
    %781 = vsyncpa %s780, 1
    %782 = vsyncpa [#allocation9], 1
    %s783 = scalar_lea.sflag [#allocation9], 1
    %784 = vsyncpa %s783, 1
    %785 = vsyncpa [#allocation4], 1
    %s786 = scalar_lea.sflag [#allocation4], 1
    %787 = vsyncpa %s786, 1

</llo_original>
